<compile_context>
chip_gen: v7x
topology: tpu7x:2x2x1
jax: 0.10.0
libtpu: 0.0.40
codegen_flags: <defaults>
</compile_context>

<pallas_src>
import functools

import numpy as np
import jax
import jax.numpy as jnp
from jax.experimental import pallas as pl
from jax.experimental.pallas import tpu as pltpu


_LANE = 128
_SUB = 8
_VMEM_BUDGET = 12 * 1024 * 1024   # stays inside the 16 MiB v5e scoped default
_VMEM_LIMIT = 32 * 1024 * 1024    # raised scoped limit (safe on v5e/v6e/v7x)


# --------------------------------------------------------------------------- #
# VMEM working-set model + tile chooser                                        #
# --------------------------------------------------------------------------- #
def _working_set_bytes(T, C_eff, C_out, KT, in_item, comp_item, out_size):
    rows = KT * C_eff + _SUB                 # im2col rows incl. bias/pad rows
    win = T + _LANE
    b = 2 * C_eff * T * in_item              # main input block (double-buffered)
    b += 2 * C_eff * _LANE * in_item         # halo block (double-buffered)
    b += 2 * C_eff * win * in_item           # concat window + activated copy
    b += rows * T * comp_item                # im2col block
    b += C_out * T * 4                       # f32 matmul accumulator
    b += 2 * C_out * T * in_item             # output tile (double-buffered)
    b += 2 * C_out * rows * max(in_item, comp_item)   # resident weights
    if out_size:
        b += C_out * T * 4                   # LeakyReLU copy for fused 1x1 conv
        b += out_size * T * (4 + 2 * in_item)
    return b


def _choose_out_tile(L_out, C_eff, C_out, KT, batch, *, max_tile, in_item,
                     comp_item, out_size, vmem_budget=_VMEM_BUDGET, min_grid=2):
    """Largest 128-multiple tile that (a) divides L_out when L_out is a
    128-multiple (no output padding/slice), (b) fits the VMEM budget, and
    (c) keeps at least `min_grid` grid steps (2 TensorCores on v7x)."""
    if L_out < 2 * _LANE:
        return L_out                                     # single full-extent tile
    if L_out % _LANE == 0:
        units = L_out // _LANE
        cands = [_LANE * d for d in range(units, 0, -1) if units % d == 0]
    else:
        top = (min(max_tile, L_out) // _LANE) * _LANE
        cands = list(range(top, 0, -_LANE))
    ok = [t for t in cands
          if t <= max_tile
          and _working_set_bytes(t, C_eff, C_out, KT, in_item, comp_item,
                                 out_size) <= vmem_budget]
    if not ok:
        ok = [_LANE]
    T = ok[0]
    if batch * pl.cdiv(L_out, T) < min_grid:
        for t in ok:
            if batch * pl.cdiv(L_out, t) >= min_grid:
                T = t
                break
    return T


# --------------------------------------------------------------------------- #
# Kernel body builder: one output tile = one im2col matmul (+ fused 1x1 conv)  #
# --------------------------------------------------------------------------- #
def _make_kernel(*, KT, T, activate, neg_slope, compute_dtype, use_halo,
                 pad_rows, fuse, out_size):
    def kernel(*refs):
        it = iter(refs)
        x_ref = next(it)
        h_ref = next(it) if use_halo else None
        w_ref = next(it)
        if fuse:
            wf_ref = next(it)
            bf_ref = next(it)
        o_ref = next(it)
        o2_ref = next(it) if fuse else None

        if use_halo:
            # Full 128-lane halo block -> lane-aligned (C_eff, T+128) window.
            win = jnp.concatenate([x_ref[0], h_ref[0]], axis=-1)
        else:
            win = x_ref[0]

        x = win
        if activate:
            # LeakyReLU(0.2) on the conv input, once per loaded window
            # (leaky_relu(0) == 0, so zero padding commutes with it).
            x = jnp.where(x > 0, x, neg_slope * x)

        # im2col: row index q*C_eff + c matches the flattened weight layout.
        taps = [x[:, q:q + T] for q in range(KT)]
        # Bias row (ones) + zero rows padding the row count to a multiple of 8.
        rid = jax.lax.broadcasted_iota(jnp.int32, (pad_rows, T), 0)
        taps.append((rid == 0).astype(x.dtype))
        xcol = jnp.concatenate(taps, axis=0).astype(compute_dtype)

        w = w_ref[...].astype(compute_dtype)               # (C_out, rows)
        y = jnp.dot(w, xcol, preferred_element_type=jnp.float32)   # (C_out, T)
        o_ref[0] = y.astype(o_ref.dtype)

        if fuse:
            # Fused trailing LeakyReLU + 1x1 conv on the tile already in VMEM.
            a = jnp.where(y > 0, y, neg_slope * y)          # f32 (C_out, T)
            if out_size == 1:
                wf = wf_ref[...].astype(jnp.float32)        # (C_out, 1)
                z = jnp.sum(wf * a, axis=0, keepdims=True)  # sublane reduce
            else:
                z = jnp.dot(wf_ref[...].astype(compute_dtype),
                            a.astype(compute_dtype),
                            preferred_element_type=jnp.float32)
            z = z + bf_ref[...].astype(jnp.float32)
            o2_ref[0] = z.astype(o2_ref.dtype)

    return kernel


# --------------------------------------------------------------------------- #
# One conv layer (optionally with the final 1x1 conv fused) as a pallas_call   #
# --------------------------------------------------------------------------- #
def conv1d_layer(x_ncl, w_oik, bias, *, stride, pad, activate_input,
                 final_w=None, final_b=None, neg_slope=0.2,
                 max_tile_out=2048, compute_dtype=jnp.float32):
    """x_ncl: (N, C_in, L)   w_oik: (C_out, C_in, K)   bias: (C_out,)
    Returns y (N, C_out, L_out) [, z (N, out_size, L_out) if final_w is given]."""
    N, C_in, L = x_ncl.shape
    C_out, C_in_w, K = w_oik.shape
    assert C_in_w == C_in
    s = stride
    L_out = (L + 2 * pad - K) // s + 1
    assert L_out > 0

    KT = pl.cdiv(K, s)                 # stride-1 taps after space-to-channel
    C_eff = C_in * s                   # effective channels after space-to-channel
    fuse = final_w is not None
    out_size = int(final_w.shape[0]) if fuse else 0

    in_item = jnp.dtype(x_ncl.dtype).itemsize
    comp_item = jnp.dtype(compute_dtype).itemsize
    T = _choose_out_tile(L_out, C_eff, C_out, KT, N, max_tile=max_tile_out,
                         in_item=in_item, comp_item=comp_item, out_size=out_size)
    n_tiles = pl.cdiv(L_out, T)
    L_out_pad = n_tiles * T

    aligned = (T % _LANE == 0)
    use_halo = aligned and (KT > 1)
    if aligned:
        blk_main = T
        L_alloc = n_tiles * T + (_LANE if use_halo else 0)
    else:                              # tiny L_out: one full-extent tile
        assert n_tiles == 1
        blk_main = L_alloc = T + KT - 1

    # ---- wrapper-side input prep: conv zero-pad + space-to-channel (1 copy) ---
    total = s * L_alloc
    right = total - L - pad
    x_p = jnp.pad(x_ncl, ((0, 0), (0, 0), (pad, max(right, 0))))
    if right < 0:
        x_p = x_p[:, :, :total]        # trailing samples unused by valid outputs
    if s > 1:
        x_p = x_p.reshape(N, C_in, L_alloc, s).transpose(0, 1, 3, 2)
        x_p = x_p.reshape(N, C_eff, L_alloc)

    # ---- weights: strided conv -> stride-1 conv over C_eff channels, KT taps --
    w_pad = jnp.pad(w_oik, ((0, 0), (0, 0), (0, KT * s - K)))
    w_eff = w_pad.reshape(C_out, C_in, KT, s).transpose(0, 1, 3, 2)
    w_eff = w_eff.reshape(C_out, C_eff, KT)
    KC = KT * C_eff
    pad_rows = (-(KC + 1)) % _SUB + 1                       # >=1, KC+pad_rows % 8 == 0
    w_flat = jnp.transpose(w_eff, (0, 2, 1)).reshape(C_out, KC)
    w_aug = jnp.concatenate(
        [w_flat, bias.reshape(C_out, 1).astype(w_flat.dtype),
         jnp.zeros((C_out, pad_rows - 1), w_flat.dtype)], axis=1)

    kernel = _make_kernel(KT=KT, T=T, activate=activate_input,
                          neg_slope=neg_slope, compute_dtype=compute_dtype,
                          use_halo=use_halo, pad_rows=pad_rows, fuse=fuse,
                          out_size=out_size)

    in_specs = [pl.BlockSpec((1, C_eff, blk_main), lambda n, j: (n, 0, j))]
    args = [x_p]
    if use_halo:
        hb = T // _LANE
        in_specs.append(pl.BlockSpec((1, C_eff, _LANE),
                                     lambda n, j: (n, 0, (j + 1) * hb)))
        args.append(x_p)
    in_specs.append(pl.BlockSpec((C_out, KC + pad_rows), lambda n, j: (0, 0)))
    args.append(w_aug)
    if fuse:
        wf2 = final_w.reshape(out_size, C_out)
        wf_arr = wf2.T if out_size == 1 else wf2            # (C_out,1) or (out,C_out)
        bf_arr = final_b.reshape(out_size, 1)
        in_specs.append(pl.BlockSpec(wf_arr.shape, lambda n, j: (0, 0)))
        in_specs.append(pl.BlockSpec((out_size, 1), lambda n, j: (0, 0)))
        args += [wf_arr, bf_arr]

    y_spec = pl.BlockSpec((1, C_out, T), lambda n, j: (n, 0, j))
    y_shape = jax.ShapeDtypeStruct((N, C_out, L_out_pad), x_ncl.dtype)
    if fuse:
        z_spec = pl.BlockSpec((1, out_size, T), lambda n, j: (n, 0, j))
        z_shape = jax.ShapeDtypeStruct((N, out_size, L_out_pad), x_ncl.dtype)
        out_shape = (y_shape, z_shape)
        out_specs = [y_spec, z_spec]
    else:
        out_shape = y_shape
        out_specs = y_spec

    result = pl.pallas_call(
        kernel,
        out_shape=out_shape,
        grid=(N, n_tiles),
        in_specs=in_specs,
        out_specs=out_specs,
        compiler_params=pltpu.CompilerParams(
            dimension_semantics=("parallel", "parallel"),
            vmem_limit_bytes=_VMEM_LIMIT),
    )(*args)

    if fuse:
        y, z = result
        if L_out_pad != L_out:
            y = y[:, :, :L_out]
            z = z[:, :, :L_out]
        return y, z
    y = result
    if L_out_pad != L_out:
        y = y[:, :, :L_out]
    return y


# --------------------------------------------------------------------------- #
# Parameter init (deterministic, PyTorch Conv1d-style) + weight_norm reparam   #
# --------------------------------------------------------------------------- #
def init_convnet_params(key, in_size, out_size, capacity, n_layers, kernel_size):
    channels = [in_size] + [capacity * (2 ** i) for i in range(n_layers)]
    params = []
    for i in range(n_layers):
        key, k1, k2 = jax.random.split(key, 3)
        c_in, c_out = channels[i], channels[i + 1]
        fan_in = c_in * kernel_size
        bound = 1.0 / np.sqrt(fan_in)
        v = jax.random.uniform(k1, (c_out, c_in, kernel_size), jnp.float32,
                               -bound, bound)
        b = jax.random.uniform(k2, (c_out,), jnp.float32, -bound, bound)
        # weight_norm: w = g * v / ||v||, with g initialized to ||v|| (identity).
        norm = jnp.sqrt(jnp.sum(v * v, axis=(1, 2), keepdims=True))
        w = norm * v / jnp.maximum(norm, 1e-12)
        params.append((w, b))
    # Final 1x1 conv (no weight_norm, no following activation).
    key, k1, k2 = jax.random.split(key, 3)
    c_in = channels[-1]
    bound = 1.0 / np.sqrt(c_in)
    w = jax.random.uniform(k1, (out_size, c_in, 1), jnp.float32, -bound, bound)
    b = jax.random.uniform(k2, (out_size,), jnp.float32, -bound, bound)
    params.append((w, b))
    return params


# --------------------------------------------------------------------------- #
# ConvNet forward (Pallas) -- features are pre-activation conv outputs (NCL)   #
# --------------------------------------------------------------------------- #
def convnet_forward(x_ncl, params, *, kernel_size, stride, n_layers,
                    max_tile_out=2048, compute_dtype=jnp.float32):
    assert n_layers >= 1
    strides = n_layers * [stride] if isinstance(stride, int) else list(stride)
    pad = kernel_size // 2              # cc.get_padding(K, s, 'centered')[0]
    x = x_ncl
    features = []
    for i in range(n_layers):
        w, b = params[i]
        kwargs = dict(stride=strides[i], pad=pad, activate_input=(i > 0),
                      max_tile_out=max_tile_out, compute_dtype=compute_dtype)
        if i == n_layers - 1:
            wf, bf = params[-1]         # final 1x1 conv fused into this kernel
            y, z = conv1d_layer(x, w, b, final_w=wf, final_b=bf, **kwargs)
            features.append(y)
            features.append(z)
        else:
            y = conv1d_layer(x, w, b, **kwargs)
            features.append(y)          # feature = pre-activation conv output
            x = y                       # LeakyReLU fused into the next kernel
    return features


# --------------------------------------------------------------------------- #
# Pure-JAX reference (for correctness check)                                   #
# --------------------------------------------------------------------------- #
def convnet_forward_ref(x_ncl, params, *, kernel_size, stride, n_layers):
    strides = n_layers * [stride] if isinstance(stride, int) else list(stride)
    pad = kernel_size // 2
    x = x_ncl
    feats = []
    for i in range(n_layers):
        w, b = params[i]
        y = jax.lax.conv_general_dilated(
            x, w, (strides[i],), [(pad, pad)],
            dimension_numbers=("NCH", "OIH", "NCH"),
            precision=jax.lax.Precision.HIGHEST)
        y = y + b[None, :, None]
        feats.append(y)
        x = jnp.where(y > 0, y, 0.2 * y)
    w, b = params[-1]
    y = jax.lax.conv_general_dilated(
        x, w, (1,), [(0, 0)], dimension_numbers=("NCH", "OIH", "NCH"),
        precision=jax.lax.Precision.HIGHEST)
    y = y + b[None, :, None]
    feats.append(y)
    return feats


def _run_and_check(N, L, in_size, out_size, capacity, n_layers, kernel_size,
                   stride, seed):
    key = jax.random.PRNGKey(seed)
    kx, kp = jax.random.split(key)
    x = jax.random.normal(kx, (N, in_size, L), jnp.float32)   # PyTorch NCL input
    params = init_convnet_params(kp, in_size, out_size, capacity, n_layers,
                                 kernel_size)

    feats = convnet_forward(x, params, kernel_size=kernel_size, stride=stride,
                            n_layers=n_layers)
    feats = jax.block_until_ready(feats)

    feats_ref = convnet_forward_ref(x, params, kernel_size=kernel_size,
                                    stride=stride, n_layers=n_layers)
    assert len(feats) == n_layers + 1
    for a, r in zip(feats, feats_ref):
        assert a.shape == r.shape, (a.shape, r.shape)
        np.testing.assert_allclose(np.asarray(a), np.asarray(r),
                                   rtol=2e-4, atol=2e-5)


if __name__ == "__main__":
    # Config A: strided stack (stride=2) on a longer sequence.  With the default
    # 2048-wide output tiles this exercises the multi-tile halo path (layer 1),
    # the big single-tile path (layers 2-3) and the fused out_size=1 final conv.
    _run_and_check(N=2, L=8192, in_size=4, out_size=1, capacity=8, n_layers=3,
                   kernel_size=5, stride=2, seed=0)

    # Config B: stride=1, non-multiple-of-8 input channels, batch 1 (forces the
    # >=2-grid-step split), out_size=2 fused final conv.
    _run_and_check(N=1, L=512, in_size=3, out_size=2, capacity=4, n_layers=2,
                   kernel_size=3, stride=1, seed=1)

    print("KERNEL_OK")
</pallas_src>

<mosaic_0001>
module attributes {stable_mosaic.version = 11 : i64} {
  func.func @kernel(%arg0: i32, %arg1: i32, %arg2: memref<1x8x2048xf32, #tpu.memory_space<vmem>>, %arg3: memref<1x8x128xf32, #tpu.memory_space<vmem>>, %arg4: memref<8x32xf32, #tpu.memory_space<vmem>>, %arg5: memref<1x8x2048xf32, #tpu.memory_space<vmem>>) attributes {dimension_semantics = [#tpu.dimension_semantics<parallel>, #tpu.dimension_semantics<parallel>], iteration_bounds = array<i64: 2, 2>, scalar_prefetch = 0 : i64, scratch_operands = 0 : i64, tpu.core_type = #tpu.core_type<tc>, window_params = [{transform_indices = @transform_0, window_bounds = array<i64: 1, 8, 2048>}, {transform_indices = @transform_1, window_bounds = array<i64: 1, 8, 128>}, {pipeline_mode = #tpu.pipeline_mode<synchronous>, transform_indices = @transform_2, window_bounds = array<i64: 8, 32>}, {transform_indices = @transform_3, window_bounds = array<i64: 1, 8, 2048>}]} {
    %c0 = arith.constant 0 : index
    %c0_0 = arith.constant 0 : index
    %c0_1 = arith.constant 0 : index
    %0 = vector.load %arg2[%c0, %c0_0, %c0_1] : memref<1x8x2048xf32, #tpu.memory_space<vmem>>, vector<1x8x2048xf32>
    %1 = vector.shape_cast %0 : vector<1x8x2048xf32> to vector<8x2048xf32>
    %c0_2 = arith.constant 0 : index
    %c0_3 = arith.constant 0 : index
    %c0_4 = arith.constant 0 : index
    %2 = vector.load %arg3[%c0_2, %c0_3, %c0_4] : memref<1x8x128xf32, #tpu.memory_space<vmem>>, vector<1x8x128xf32>
    %3 = vector.shape_cast %2 : vector<1x8x128xf32> to vector<8x128xf32>
    %4 = tpu.concatenate %1, %3 in 1 : vector<8x2048xf32>, vector<8x128xf32> -> vector<8x2176xf32>
    %5 = vector.extract_strided_slice %4 {offsets = [0, 0], sizes = [8, 2048], strides = [1, 1]} : vector<8x2176xf32> to vector<8x2048xf32>
    %6 = vector.extract_strided_slice %4 {offsets = [0, 1], sizes = [8, 2048], strides = [1, 1]} : vector<8x2176xf32> to vector<8x2048xf32>
    %7 = vector.extract_strided_slice %4 {offsets = [0, 2], sizes = [8, 2048], strides = [1, 1]} : vector<8x2176xf32> to vector<8x2048xf32>
    %8 = tpu.iota {dimensions = array<i32: 0>} : vector<8x2048xi32>
    %c0_i32 = arith.constant 0 : i32
    %9 = vector.broadcast %c0_i32 : i32 to vector<8x2048xi32>
    %10 = arith.cmpi eq, %8, %9 : vector<8x2048xi32>
    %11 = arith.extui %10 : vector<8x2048xi1> to vector<8x2048xi32>
    %12 = arith.sitofp %11 : vector<8x2048xi32> to vector<8x2048xf32>
    %13 = tpu.concatenate %5, %6, %7, %12 in 0 : vector<8x2048xf32>, vector<8x2048xf32>, vector<8x2048xf32>, vector<8x2048xf32> -> vector<32x2048xf32>
    %c0_5 = arith.constant 0 : index
    %c0_6 = arith.constant 0 : index
    %14 = vector.load %arg4[%c0_5, %c0_6] : memref<8x32xf32, #tpu.memory_space<vmem>>, vector<8x32xf32>
    %cst = arith.constant dense<0.000000e+00> : vector<8x2048xf32>
    %15 = tpu.matmul %14, %13, %cst {dimension_numbers = #tpu.dot_dimension_numbers<[1], [0], [0], [1], [0, 0, 1, 1], [], []>} : vector<8x32xf32>, vector<32x2048xf32>, vector<8x2048xf32> -> vector<8x2048xf32>
    %c0_7 = arith.constant 0 : index
    %c0_8 = arith.constant 0 : index
    %c0_9 = arith.constant 0 : index
    %16 = vector.load %arg5[%c0_7, %c0_8, %c0_9] : memref<1x8x2048xf32, #tpu.memory_space<vmem>>, vector<1x8x2048xf32>
    %17 = vector.shape_cast %16 : vector<1x8x2048xf32> to vector<8x2048xf32>
    %18 = vector.shape_cast %15 : vector<8x2048xf32> to vector<1x8x2048xf32>
    tpu.vector_store %arg5[%c0_7, %c0_8, %c0_9], %18 {strides = array<i32>} : memref<1x8x2048xf32, #tpu.memory_space<vmem>>, vector<1x8x2048xf32>,
    return
  }
  func.func @transform_0(%arg0: i32, %arg1: i32) -> (i32, i32, i32) {
    %c0_i32 = arith.constant 0 : i32
    %c0_i32_0 = arith.constant 0 : i32
    return %arg0, %c0_i32, %arg1 : i32, i32, i32
  }
  func.func @transform_1(%arg0: i32, %arg1: i32) -> (i32, i32, i32) {
    %c1_i32 = arith.constant 1 : i32
    %0 = arith.addi %arg1, %c1_i32 : i32
    %c16_i32 = arith.constant 16 : i32
    %1 = arith.muli %0, %c16_i32 : i32
    %c0_i32 = arith.constant 0 : i32
    %c0_i32_0 = arith.constant 0 : i32
    return %arg0, %c0_i32, %1 : i32, i32, i32
  }
  func.func @transform_2(%arg0: i32, %arg1: i32) -> (i32, i32) {
    %c0_i32 = arith.constant 0 : i32
    %c0_i32_0 = arith.constant 0 : i32
    %c0_i32_1 = arith.constant 0 : i32
    return %c0_i32, %c0_i32_0 : i32, i32
  }
  func.func @transform_3(%arg0: i32, %arg1: i32) -> (i32, i32, i32) {
    %c0_i32 = arith.constant 0 : i32
    %c0_i32_0 = arith.constant 0 : i32
    return %arg0, %c0_i32, %arg1 : i32, i32, i32
  }
}

</mosaic_0001>

<llo_original>
// kernel: tpu_custom_call.1
$region0: #{tpu_custom_call.1}
  #allocation0 [shape = 'u32[]', space=smem, size = 0x4, offset = 0x4, fixed_abs, tag = 'smem constant byte address 0x4 - core index']
  #allocation1 [shape = 'u32[144,128]{1,0:T(1,128)}', space=vmem, size = 0x12000, scoped, tag = 'internal scratch']
  %s0 = inlined_call_operand.hbm [shape: f32[2,8,4224], index: 0, kind: input, shape index: {}]
  %s1 = inlined_call_operand.hbm [shape: f32[2,8,4224], index: 1, kind: input, shape index: {}]
  %s2 = inlined_call_operand.hbm [shape: f32[8,32], index: 2, kind: input, shape index: {}]
  %s3 = inlined_call_operand.hbm [shape: f32[2,8,4096], index: 3, kind: output, shape index: {}]
  %s4 = sld [smem:[#allocation0]]
  $region57: #{tpu_custom_call.1} parent=0
    _
  %s6 = ssub.s32 1, %s4
  %s7 = scalar_select 0, %s6, %s4
  $region1: #{tpu_custom_call.1} parent=0
    #allocation2 [shape = 'u8[131072]{0}', space=vmem, size = 0x20000, scoped, tag = 'input window, operand 0']
    #allocation3 [shape = 's32[2]{0}', space=sflag, size = 0x8, scoped, tag = 'scoped memory for tpu_custom_call.1']
    #allocation4 [shape = 's32[2]{0}', space=sflag, size = 0x8, scoped, tag = 'scoped memory for tpu_custom_call.1']
    #allocation5 [shape = 'u8[8192]{0}', space=vmem, size = 0x2000, scoped, tag = 'input window, operand 1']
    #allocation6 [shape = 's32[2]{0}', space=sflag, size = 0x8, scoped, tag = 'scoped memory for tpu_custom_call.1']
    #allocation7 [shape = 'u8[4096]{0}', space=vmem, size = 0x1000, scoped, tag = 'input window, operand 2, single buffered']
    #allocation8 [shape = 'u8[131072]{0}', space=vmem, size = 0x20000, scoped, tag = 'output window, operand 0']
    %8 = vsyncpa [#allocation3], 0
    %s9 = scalar_lea.sflag [#allocation3], 1
    %10 = vsyncpa %s9, 0
    %11 = vsyncpa [#allocation6], 0
    %s12 = scalar_lea.sflag [#allocation6], 1
    %13 = vsyncpa %s12, 0
    %14 = vsyncpa [#allocation4], 0
    %s15 = scalar_lea.sflag [#allocation4], 1
    %16 = vsyncpa %s15, 0
    loop: start=0, step=1, limit=6
    $region2: #{tpu_custom_call.1} parent=1 // loop_pre_header
      _
    $region3: #{tpu_custom_call.1} parent=1 // loop_header
      %s18 = sphi 0, %s22
      %p19 = scmp.ge.s32.totalorder %s18, 6
      %s25 = sphi 0, %s37
      %s26 = sphi 0, %s33
      %s27 = sphi 0, %s25
      %s28 = sphi 0, %s26
      %s29 = sphi 0, %s27
      %s30 = sphi 0, %s28
      %s42 = sphi 0, %s44
      %s45 = sphi 0, %s42
      %s46 = sphi 0, %s45
      %s62 = sphi 0, %s46
      %s74 = sphi 0, %s76
      %s77 = sphi 0, %s74
      %s78 = sphi 0, %s77
      %s94 = sphi 0, %s78
      %s98 = sphi 0, %s98
      %s100 = sphi 0, %s98
      %s101 = sphi 0, %s100
      %s115 = sphi 0, %s101
      %s123 = sphi 0, %s125
      %s126 = sphi 0, %s123
      %s127 = sphi 0, %s126
      %s143 = sphi 0, %s127
    $region4: #{tpu_custom_call.1} parent=1 // loop_header_branch
      %21 = sbr.rel (%p19) target = $region8
    $region5: #{tpu_custom_call.1} parent=1 // loop_body
      %s23 = ssub.s32 %s18, 1
      %s24 = ssub.s32 %s18, 2
      %s31 = sadd.s32 1, %s26
      %p32 = scmp.ge.s32.totalorder %s31, 2
      %s33 = scalar_select %p32, 0, %s31
      %s34 = sadd.s32 1, %s25
      %s35 = scalar_select %p32, %s34, %s25
      %p36 = scmp.ge.s32.totalorder %s35, 2
      %s37 = scalar_select %p36, 0, %s35
      %s38 = ssub.s32 %s25, %s37
      %s39 = ssub.s32 %s26, %s33
      %s40 = sor.u32 %s38, %s39
      %p41 = scmp.eq.s32.totalorder %s40, 0
      %s43 = sadd.s32 %s42, 1
      %s44 = scalar_select %p41, %s42, %s43
      %p47 = pneg %p41
      %p48 = scmp.eq.s32.totalorder %s18, 3
      %p49 = por %p47, %p48
      %p50 = scmp.ne.s32.totalorder %s42, %s45
      %p51 = scmp.eq.s32.totalorder %s18, 0
      %p52 = por %p50, %p51
      %p53 = scmp.ne.s32.totalorder %s42, %s45
      %p54 = scmp.eq.s32.totalorder %s23, 3
      %p55 = por %p53, %p54
      %p56 = scmp.ne.s32.totalorder %s45, %s46
      %p57 = scmp.eq.s32.totalorder %s23, 0
      %p58 = por %p56, %p57
      %p59 = scmp.ne.s32.totalorder %s45, %s46
      %p60 = scmp.eq.s32.totalorder %s24, 3
      %p61 = por %p59, %p60
      %p63 = scmp.ne.s32.totalorder %s46, %s62
      %p64 = scmp.eq.s32.totalorder %s24, 0
      %p65 = por %p63, %p64
      %s66 = sadd.s32 %s26, 1
      %s67 = smul.u32 %s66, 16
      %s68 = sadd.s32 %s33, 1
      %s69 = smul.u32 %s68, 16
      %s70 = ssub.s32 %s25, %s37
      %s71 = ssub.s32 %s67, %s69
      %s72 = sor.u32 %s70, %s71
      %p73 = scmp.eq.s32.totalorder %s72, 0
      %s75 = sadd.s32 %s74, 1
      %s76 = scalar_select %p73, %s74, %s75
      %p79 = pneg %p73
      %p80 = scmp.eq.s32.totalorder %s18, 3
      %p81 = por %p79, %p80
      %p82 = scmp.ne.s32.totalorder %s74, %s77
      %p83 = scmp.eq.s32.totalorder %s18, 0
      %p84 = por %p82, %p83
      %p85 = scmp.ne.s32.totalorder %s74, %s77
      %p86 = scmp.eq.s32.totalorder %s23, 3
      %p87 = por %p85, %p86
      %p88 = scmp.ne.s32.totalorder %s77, %s78
      %p89 = scmp.eq.s32.totalorder %s23, 0
      %p90 = por %p88, %p89
      %p91 = scmp.ne.s32.totalorder %s77, %s78
      %p92 = scmp.eq.s32.totalorder %s24, 3
      %p93 = por %p91, %p92
      %p95 = scmp.ne.s32.totalorder %s78, %s94
      %p96 = scmp.eq.s32.totalorder %s24, 0
      %p97 = por %p95, %p96
      %s99 = sadd.s32 %s98, 1
      %p102 = scmp.eq.s32.totalorder %s18, 3
      %p103 = scmp.ne.s32.totalorder %s98, %s100
      %p104 = scmp.eq.s32.totalorder %s18, 0
      %p105 = por %p103, %p104
      %p106 = scmp.ne.s32.totalorder %s98, %s100
      %p107 = scmp.eq.s32.totalorder %s23, 3
      %p108 = por %p106, %p107
      %p109 = scmp.ne.s32.totalorder %s100, %s101
      %p110 = scmp.eq.s32.totalorder %s23, 0
      %p111 = por %p109, %p110
      %p112 = scmp.ne.s32.totalorder %s100, %s101
      %p113 = scmp.eq.s32.totalorder %s24, 3
      %p114 = por %p112, %p113
      %p116 = scmp.ne.s32.totalorder %s101, %s115
      %p117 = scmp.eq.s32.totalorder %s24, 0
      %p118 = por %p116, %p117
      %s119 = ssub.s32 %s25, %s37
      %s120 = ssub.s32 %s26, %s33
      %s121 = sor.u32 %s119, %s120
      %p122 = scmp.eq.s32.totalorder %s121, 0
      %s124 = sadd.s32 %s123, 1
      %s125 = scalar_select %p122, %s123, %s124
      %p128 = pneg %p122
      %p129 = scmp.eq.s32.totalorder %s18, 3
      %p130 = por %p128, %p129
      %p131 = scmp.ne.s32.totalorder %s123, %s126
      %p132 = scmp.eq.s32.totalorder %s18, 0
      %p133 = por %p131, %p132
      %p134 = scmp.ne.s32.totalorder %s123, %s126
      %p135 = scmp.eq.s32.totalorder %s23, 3
      %p136 = por %p134, %p135
      %p137 = scmp.ne.s32.totalorder %s126, %s127
      %p138 = scmp.eq.s32.totalorder %s23, 0
      %p139 = por %p137, %p138
      %p140 = scmp.ne.s32.totalorder %s126, %s127
      %p141 = scmp.eq.s32.totalorder %s24, 3
      %p142 = por %p140, %p141
      %p144 = scmp.ne.s32.totalorder %s127, %s143
      %p145 = scmp.eq.s32.totalorder %s24, 0
      %p146 = por %p144, %p145
      %p147 = scmp.le.s32.totalorder 1, %s18
      %p148 = scmp.lt.s32.totalorder %s18, 5
      %p149 = pnand %p147, %p148
      %p150 = pneg %p149
      // Predicated region
      $region9: #{tpu_custom_call.1} parent=5 // pred_check
        _
      $region10: #{tpu_custom_call.1} parent=5 // pred_check_branch
        %152 = sbr.rel (%p149) target = $region12
      $region11: #{tpu_custom_call.1} parent=5 // pred_region
        %s153 = ssub.s32 %s18, 1
        // Predicated region
        $region13: #{tpu_custom_call.1} parent=11 // pred_check
          %p154 = pneg %p111
        $region14: #{tpu_custom_call.1} parent=11 // pred_check_branch
          %156 = sbr.rel (%p154) target = $region16
        $region15: #{tpu_custom_call.1} parent=11 // pred_region
          %s158 = ssub.s32 128, 128
          %159 = vsyncadd [#allocation6], %s158
          %s161 = sshll.u32 [#allocation7], 4
          %s162 = int_to_ptr.vmem [resolvable:$true] %s161
          %164 = dma.hbm_to_vmem [thread:$0]  %s2, 128, %s162, [#allocation6]
        $region16: #{tpu_custom_call.1} parent=11 // pred_fallthru
          _
      $region12: #{tpu_custom_call.1} parent=5 // pred_fallthru
        _
      %p165 = scmp.lt.s32.totalorder %s18, 4
      // Predicated region
      $region17: #{tpu_custom_call.1} parent=5 // pred_check
        %p166 = pneg %p165
      $region18: #{tpu_custom_call.1} parent=5 // pred_check_branch
        %168 = sbr.rel (%p166) target = $region20
      $region19: #{tpu_custom_call.1} parent=5 // pred_region
        // Predicated region
        $region21: #{tpu_custom_call.1} parent=19 // pred_check
          %p169 = pneg %p52
        $region22: #{tpu_custom_call.1} parent=19 // pred_check_branch
          %171 = sbr.rel (%p169) target = $region24
        $region23: #{tpu_custom_call.1} parent=19 // pred_region
          %s172 = sand.u32 %s42, 1
          %s173 = scalar_lea.sflag [#allocation3], %s172
          %s174 = sand.u32 %s42, 1
          %s175 = smul.addr %s174, 128
          %s176 = scalar_lea.vmem [#allocation2], %s175
          %s177 = smul.u32 16, %s26
          %s178 = ssub.s32 33, %s177
          %p179 = scmp.lt.s32.totalorder %s178, 16
          %s180 = scalar_select %p179, %s178, 16
          %s181 = smul.u32 128, %s180
          %s183 = ssub.s32 2048, %s181
          %184 = vsyncadd %s173, %s183
          %p185 = scmp.ne.s32.totalorder 0, %s181
          %s186 = smul.addr %s25, 33
          %s187 = sadd.s32 %s177, %s186
          %s188 = smul.addr %s187, 128
          %s189 = scalar_lea.hbm %s0, %s188
          %s190 = smul.u32 %s180, 8
          %s191 = sshll.u32 %s190, 4
          %s192 = sshll.u32 %s176, 4
          %s193 = int_to_ptr.vmem [resolvable:$true] %s192
          %195 = dma.hbm_to_vmem [thread:$0]  (%p185), %s189, %s191, %s193, %s173
        $region24: #{tpu_custom_call.1} parent=19 // pred_fallthru
          _
        // Predicated region
        $region25: #{tpu_custom_call.1} parent=19 // pred_check
          %p196 = pneg %p84
        $region26: #{tpu_custom_call.1} parent=19 // pred_check_branch
          %198 = sbr.rel (%p196) target = $region28
        $region27: #{tpu_custom_call.1} parent=19 // pred_region
          %s199 = sand.u32 %s18, 1
          %s200 = scalar_lea.sflag [#allocation6], %s199
          %s201 = sand.u32 %s74, 1
          %s202 = smul.addr %s201, 8
          %s203 = scalar_lea.vmem [#allocation5], %s202
          %s204 = sadd.s32 %s26, 1
          %s205 = smul.u32 %s204, 16
          %s207 = ssub.s32 128, 128
          %208 = vsyncadd %s200, %s207
          %s209 = smul.addr %s25, 33
          %s210 = sadd.s32 %s205, %s209
          %s211 = smul.addr %s210, 128
          %s212 = scalar_lea.hbm %s1, %s211
          %s214 = sshll.u32 %s203, 4
          %s215 = int_to_ptr.vmem [resolvable:$true] %s214
          %217 = dma.hbm_to_vmem [thread:$0]  %s212, 128, %s215, %s200
        $region28: #{tpu_custom_call.1} parent=19 // pred_fallthru
          _
      $region20: #{tpu_custom_call.1} parent=5 // pred_fallthru
        _
      %p218 = scmp.le.s32.totalorder 1, %s18
      %p219 = scmp.lt.s32.totalorder %s18, 5
      %p220 = pnand %p218, %p219
      %p221 = pneg %p220
      // Predicated region
      $region29: #{tpu_custom_call.1} parent=5 // pred_check
        _
      $region30: #{tpu_custom_call.1} parent=5 // pred_check_branch
        %223 = sbr.rel (%p220) target = $region32
      $region31: #{tpu_custom_call.1} parent=5 // pred_region
        %s224 = ssub.s32 %s18, 1
        %s225 = sand.u32 %s45, 1
        %s226 = scalar_lea.sflag [#allocation3], %s225
        %s227 = sand.u32 %s45, 1
        %s228 = smul.addr %s227, 128
        %s229 = scalar_lea.vmem [#allocation2], %s228
        // Predicated region
        $region33: #{tpu_custom_call.1} parent=31 // pred_check
          %p230 = pneg %p58
        $region34: #{tpu_custom_call.1} parent=31 // pred_check_branch
          %232 = sbr.rel (%p230) target = $region36
        $region35: #{tpu_custom_call.1} parent=31 // pred_region
          %233 = dma.done %s226, 2048
        $region36: #{tpu_custom_call.1} parent=31 // pred_fallthru
          _
        %s234 = sand.u32 %s23, 1
        %s235 = scalar_lea.sflag [#allocation6], %s234
        %s236 = sand.u32 %s77, 1
        %s237 = smul.addr %s236, 8
        %s238 = scalar_lea.vmem [#allocation5], %s237
        // Predicated region
        $region37: #{tpu_custom_call.1} parent=31 // pred_check
          %p239 = pneg %p90
        $region38: #{tpu_custom_call.1} parent=31 // pred_check_branch
          %241 = sbr.rel (%p239) target = $region40
        $region39: #{tpu_custom_call.1} parent=31 // pred_region
          %242 = dma.done %s235, 128
        $region40: #{tpu_custom_call.1} parent=31 // pred_fallthru
          _
        // Predicated region
        $region41: #{tpu_custom_call.1} parent=31 // pred_check
          %p243 = pneg %p111
        $region42: #{tpu_custom_call.1} parent=31 // pred_check_branch
          %245 = sbr.rel (%p243) target = $region44
        $region43: #{tpu_custom_call.1} parent=31 // pred_region
          %246 = dma.done [#allocation6], 128
        $region44: #{tpu_custom_call.1} parent=31 // pred_fallthru
          _
        %s247 = sand.u32 %s45, 1
        %s248 = scalar_lea.sflag [#allocation3], %s247
        %s249 = sand.u32 %s45, 1
        %s250 = smul.addr %s249, 128
        %s251 = scalar_lea.vmem [#allocation2], %s250
        %p252 = pneg %p58
        %p253 = pneg %p55
        %s254 = sand.u32 %s23, 1
        %s255 = scalar_lea.sflag [#allocation6], %s254
        %s256 = sand.u32 %s77, 1
        %s257 = smul.addr %s256, 8
        %s258 = scalar_lea.vmem [#allocation5], %s257
        %p259 = pneg %p90
        %p260 = pneg %p87
        %p261 = pneg %p111
        %p262 = pneg %p108
        %p263 = pneg %p139
        %p264 = pneg %p136
        %s265 = sand.u32 %s126, 1
        %s266 = scalar_lea.sflag [#allocation4], %s265
        %s267 = sand.u32 %s126, 1
        %s268 = smul.addr %s267, 128
        %s269 = scalar_lea.vmem [#allocation8], %s268
        %s270 = smul.u32 16, %s28
        %s271 = ssub.s32 33, %s270
        %p272 = scmp.lt.s32.totalorder %s271, 16
        %s273 = scalar_select %p272, %s271, 16
        %s274 = smul.u32 128, %s273
        %s275 = sadd.s32 %s28, 1
        %s276 = smul.u32 %s275, 16
        %s277 = smul.u32 16, %s28
        %v278 = vld [vmem:[%s229] sm:$0xff]
        %v279 = vld [vmem:[%s229 + $0x8] sm:$0xff]
        %v280 = vld [vmem:[%s229 + $0x10] sm:$0xff]
        %v281 = vld [vmem:[%s229 + $0x18] sm:$0xff]
        %v282 = vld [vmem:[%s229 + $0x20] sm:$0xff]
        %v283 = vld [vmem:[%s229 + $0x28] sm:$0xff]
        %v284 = vld [vmem:[%s229 + $0x30] sm:$0xff]
        %v285 = vld [vmem:[%s229 + $0x38] sm:$0xff]
        %v286 = vld [vmem:[%s229 + $0x40] sm:$0xff]
        %v287 = vld [vmem:[%s229 + $0x48] sm:$0xff]
        %v288 = vld [vmem:[%s229 + $0x50] sm:$0xff]
        %v289 = vld [vmem:[%s229 + $0x58] sm:$0xff]
        %v290 = vld [vmem:[%s229 + $0x60] sm:$0xff]
        %v291 = vld [vmem:[%s229 + $0x68] sm:$0xff]
        %v292 = vld [vmem:[%s229 + $0x70] sm:$0xff]
        %v293 = vld [vmem:[%s229 + $0x78] sm:$0xff]
        %v294 = vld [vmem:[%s238] sm:$0xff]
        %v295 = vlaneseq
        %v296 = vshrl.u32 %v295, 7
        %vm297 = vcmp.eq.s32.totalorder %v296, 0
        %v298 = vsel %vm297, 1, 0
        %v299 = vcvt.s32.f32 %v298
        %317 = vrot.lane.b32.xlu0 %v278, 127
        %v318 = vpop.permute.xlu0 %317
        %319 = vrot.lane.b32.xlu0 %v279, 127
        %v320 = vpop.permute.xlu0 %319
        %321 = vrot.lane.b32.xlu0 %v280, 127
        %v322 = vpop.permute.xlu0 %321
        %323 = vrot.lane.b32.xlu0 %v281, 127
        %v324 = vpop.permute.xlu0 %323
        %325 = vrot.lane.b32.xlu0 %v282, 127
        %v326 = vpop.permute.xlu0 %325
        %327 = vrot.lane.b32.xlu0 %v283, 127
        %v328 = vpop.permute.xlu0 %327
        %329 = vrot.lane.b32.xlu0 %v284, 127
        %v330 = vpop.permute.xlu0 %329
        %331 = vrot.lane.b32.xlu0 %v285, 127
        %v332 = vpop.permute.xlu0 %331
        %333 = vrot.lane.b32.xlu0 %v286, 127
        %v334 = vpop.permute.xlu0 %333
        %335 = vrot.lane.b32.xlu0 %v287, 127
        %v336 = vpop.permute.xlu0 %335
        %337 = vrot.lane.b32.xlu0 %v288, 127
        %v338 = vpop.permute.xlu0 %337
        %339 = vrot.lane.b32.xlu0 %v289, 127
        %v340 = vpop.permute.xlu0 %339
        %341 = vrot.lane.b32.xlu0 %v290, 127
        %v342 = vpop.permute.xlu0 %341
        %343 = vrot.lane.b32.xlu0 %v291, 127
        %v344 = vpop.permute.xlu0 %343
        %345 = vrot.lane.b32.xlu0 %v292, 127
        %v346 = vpop.permute.xlu0 %345
        %347 = vrot.lane.b32.xlu0 %v293, 127
        %v348 = vpop.permute.xlu0 %347
        %349 = vrot.lane.b32.xlu0 %v294, 127
        %v350 = vpop.permute.xlu0 %349
        %vm351 = vcmask 1039360
        %v352 = vsel %vm351, %v318, %v320
        %v353 = vsel %vm351, %v320, %v322
        %v354 = vsel %vm351, %v322, %v324
        %v355 = vsel %vm351, %v324, %v326
        %v356 = vsel %vm351, %v326, %v328
        %v357 = vsel %vm351, %v328, %v330
        %v358 = vsel %vm351, %v330, %v332
        %v359 = vsel %vm351, %v332, %v334
        %v360 = vsel %vm351, %v334, %v336
        %v361 = vsel %vm351, %v336, %v338
        %v362 = vsel %vm351, %v338, %v340
        %v363 = vsel %vm351, %v340, %v342
        %v364 = vsel %vm351, %v342, %v344
        %v365 = vsel %vm351, %v344, %v346
        %v366 = vsel %vm351, %v346, %v348
        %v367 = vsel %vm351, %v348, %v350
        %384 = vrot.lane.b32.xlu0 %v278, 126
        %v385 = vpop.permute.xlu0 %384
        %386 = vrot.lane.b32.xlu0 %v279, 126
        %v387 = vpop.permute.xlu0 %386
        %388 = vrot.lane.b32.xlu0 %v280, 126
        %v389 = vpop.permute.xlu0 %388
        %390 = vrot.lane.b32.xlu0 %v281, 126
        %v391 = vpop.permute.xlu0 %390
        %392 = vrot.lane.b32.xlu0 %v282, 126
        %v393 = vpop.permute.xlu0 %392
        %394 = vrot.lane.b32.xlu0 %v283, 126
        %v395 = vpop.permute.xlu0 %394
        %396 = vrot.lane.b32.xlu0 %v284, 126
        %v397 = vpop.permute.xlu0 %396
        %398 = vrot.lane.b32.xlu0 %v285, 126
        %v399 = vpop.permute.xlu0 %398
        %400 = vrot.lane.b32.xlu0 %v286, 126
        %v401 = vpop.permute.xlu0 %400
        %402 = vrot.lane.b32.xlu0 %v287, 126
        %v403 = vpop.permute.xlu0 %402
        %404 = vrot.lane.b32.xlu0 %v288, 126
        %v405 = vpop.permute.xlu0 %404
        %406 = vrot.lane.b32.xlu0 %v289, 126
        %v407 = vpop.permute.xlu0 %406
        %408 = vrot.lane.b32.xlu0 %v290, 126
        %v409 = vpop.permute.xlu0 %408
        %410 = vrot.lane.b32.xlu0 %v291, 126
        %v411 = vpop.permute.xlu0 %410
        %412 = vrot.lane.b32.xlu0 %v292, 126
        %v413 = vpop.permute.xlu0 %412
        %414 = vrot.lane.b32.xlu0 %v293, 126
        %v415 = vpop.permute.xlu0 %414
        %416 = vrot.lane.b32.xlu0 %v294, 126
        %v417 = vpop.permute.xlu0 %416
        %vm418 = vcmask 1031168
        %v419 = vsel %vm418, %v385, %v387
        %v420 = vsel %vm418, %v387, %v389
        %v421 = vsel %vm418, %v389, %v391
        %v422 = vsel %vm418, %v391, %v393
        %v423 = vsel %vm418, %v393, %v395
        %v424 = vsel %vm418, %v395, %v397
        %v425 = vsel %vm418, %v397, %v399
        %v426 = vsel %vm418, %v399, %v401
        %v427 = vsel %vm418, %v401, %v403
        %v428 = vsel %vm418, %v403, %v405
        %v429 = vsel %vm418, %v405, %v407
        %v430 = vsel %vm418, %v407, %v409
        %v431 = vsel %vm418, %v409, %v411
        %v432 = vsel %vm418, %v411, %v413
        %v433 = vsel %vm418, %v413, %v415
        %v434 = vsel %vm418, %v415, %v417
        %v451 = vld [vmem:[#allocation7] sm:$0xff]
        %vm452 = vcmask 261120
        %v454 = vsel %vm452, %v451, 0
        %456 = vmatprep.subr.mxu0 %v279
        %457 = vmatpush1.msra.mxu0 %v278
        %458 = vmatprep.subr.mxu0 %v353
        %459 = vmatpush1.msra.mxu0 %v352
        %460 = vmatprep.subr.mxu0 %v420
        %461 = vmatpush1.msra.mxu0 %v419
        %462 = vmatprep.subr.mxu0 %v299
        %463 = vmatpush1.msra.mxu0 %v299
        %464 = vmatprep.subr.mxu0 0.0
        %465 = vmatpush1.msra.mxu0 0.0
        %466 = vmatprep.subr.mxu0 0.0
        %467 = vmatpush1.msra.mxu0 0.0
        %468 = vmatprep.subr.mxu0 0.0
        %469 = vmatpush1.msra.mxu0 0.0
        %470 = vmatprep.subr.mxu0 0.0
        %471 = vmatpush1.msra.mxu0 0.0
        %472 = vmatprep.subr.mxu0 0.0
        %473 = vmatpush1.msra.mxu0 0.0
        %474 = vmatprep.subr.mxu0 0.0
        %475 = vmatpush1.msra.mxu0 0.0
        %476 = vmatprep.subr.mxu0 0.0
        %477 = vmatpush1.msra.mxu0 0.0
        %478 = vmatprep.subr.mxu0 0.0
        %479 = vmatpush1.msra.mxu0 0.0
        %480 = vmatprep.subr.mxu0 0.0
        %481 = vmatpush1.msra.mxu0 0.0
        %482 = vmatprep.subr.mxu0 0.0
        %483 = vmatpush1.msra.mxu0 0.0
        %484 = vmatprep.subr.mxu0 0.0
        %485 = vmatpush1.msra.mxu0 0.0
        %486 = vmatprep.subr.mxu0 0.0
        %487 = vmatpush1.msra.mxu0 0.0
        %488 = vmatprep.subr.mxu0 0.0
        %489 = vmatpush1.msra.mxu0 0.0
        %490 = vmatprep.subr.mxu0 0.0
        %491 = vmatpush1.msra.mxu0 0.0
        %492 = vmatprep.subr.mxu0 0.0
        %493 = vmatpush1.msra.mxu0 0.0
        %494 = vmatprep.subr.mxu0 0.0
        %495 = vmatpush1.msra.mxu0 0.0
        %496 = vmatprep.subr.mxu0 0.0
        %497 = vmatpush1.msra.mxu0 0.0
        %498 = vmatprep.subr.mxu0 0.0
        %499 = vmatpush1.msra.mxu0 0.0
        %500 = vmatprep.subr.mxu0 0.0
        %501 = vmatpush1.msra.mxu0 0.0
        %502 = vmatprep.subr.mxu0 0.0
        %503 = vmatpush1.msra.mxu0 0.0
        %504 = vmatprep.subr.mxu0 0.0
        %505 = vmatpush1.msra.mxu0 0.0
        %506 = vmatprep.subr.mxu0 0.0
        %507 = vmatpush1.msra.mxu0 0.0
        %508 = vmatprep.subr.mxu0 0.0
        %509 = vmatpush1.msra.mxu0 0.0
        %510 = vmatprep.subr.mxu0 0.0
        %511 = vmatpush1.msra.mxu0 0.0
        %512 = vmatprep.subr.mxu0 0.0
        %513 = vmatpush1.msra.mxu0 0.0
        %514 = vmatprep.subr.mxu0 0.0
        %515 = vmatpush1.msra.mxu0 0.0
        %516 = vmatprep.subr.mxu0 0.0
        %517 = vmatpush1.msra.mxu0 0.0
        %518 = vmatprep.subr.mxu0 0.0
        %519 = vmatpush1.msra.mxu0 0.0
        %520 = vmatprep.mubr.f32.mxu0 0.0
        %521 = vmatmul.mubr.f32.gmra.mrb[0].mxu0 %v454
        %v522 = vpop.f32.mrb[0].mxu0
        %v523 = vadd.f32 0.0, %v522
        %v524 = vpop.f32.mrb[0].mxu0
        %v525 = vadd.f32 0.0, %v524
        %526 = vdwg.mxu0
        %527 = vmatprep.subr.mxu0 %v281
        %528 = vmatpush1.msra.mxu0 %v280
        %529 = vmatprep.subr.mxu0 %v355
        %530 = vmatpush1.msra.mxu0 %v354
        %531 = vmatprep.subr.mxu0 %v422
        %532 = vmatpush1.msra.mxu0 %v421
        %533 = vmatprep.subr.mxu0 %v299
        %534 = vmatpush1.msra.mxu0 %v299
        %535 = vmatprep.subr.mxu0 0.0
        %536 = vmatpush1.msra.mxu0 0.0
        %537 = vmatprep.subr.mxu0 0.0
        %538 = vmatpush1.msra.mxu0 0.0
        %539 = vmatprep.subr.mxu0 0.0
        %540 = vmatpush1.msra.mxu0 0.0
        %541 = vmatprep.subr.mxu0 0.0
        %542 = vmatpush1.msra.mxu0 0.0
        %543 = vmatprep.subr.mxu0 0.0
        %544 = vmatpush1.msra.mxu0 0.0
        %545 = vmatprep.subr.mxu0 0.0
        %546 = vmatpush1.msra.mxu0 0.0
        %547 = vmatprep.subr.mxu0 0.0
        %548 = vmatpush1.msra.mxu0 0.0
        %549 = vmatprep.subr.mxu0 0.0
        %550 = vmatpush1.msra.mxu0 0.0
        %551 = vmatprep.subr.mxu0 0.0
        %552 = vmatpush1.msra.mxu0 0.0
        %553 = vmatprep.subr.mxu0 0.0
        %554 = vmatpush1.msra.mxu0 0.0
        %555 = vmatprep.subr.mxu0 0.0
        %556 = vmatpush1.msra.mxu0 0.0
        %557 = vmatprep.subr.mxu0 0.0
        %558 = vmatpush1.msra.mxu0 0.0
        %559 = vmatprep.subr.mxu0 0.0
        %560 = vmatpush1.msra.mxu0 0.0
        %561 = vmatprep.subr.mxu0 0.0
        %562 = vmatpush1.msra.mxu0 0.0
        %563 = vmatprep.subr.mxu0 0.0
        %564 = vmatpush1.msra.mxu0 0.0
        %565 = vmatprep.subr.mxu0 0.0
        %566 = vmatpush1.msra.mxu0 0.0
        %567 = vmatprep.subr.mxu0 0.0
        %568 = vmatpush1.msra.mxu0 0.0
        %569 = vmatprep.subr.mxu0 0.0
        %570 = vmatpush1.msra.mxu0 0.0
        %571 = vmatprep.subr.mxu0 0.0
        %572 = vmatpush1.msra.mxu0 0.0
        %573 = vmatprep.subr.mxu0 0.0
        %574 = vmatpush1.msra.mxu0 0.0
        %575 = vmatprep.subr.mxu0 0.0
        %576 = vmatpush1.msra.mxu0 0.0
        %577 = vmatprep.subr.mxu0 0.0
        %578 = vmatpush1.msra.mxu0 0.0
        %579 = vmatprep.subr.mxu0 0.0
        %580 = vmatpush1.msra.mxu0 0.0
        %581 = vmatprep.subr.mxu0 0.0
        %582 = vmatpush1.msra.mxu0 0.0
        %583 = vmatprep.subr.mxu0 0.0
        %584 = vmatpush1.msra.mxu0 0.0
        %585 = vmatprep.subr.mxu0 0.0
        %586 = vmatpush1.msra.mxu0 0.0
        %587 = vmatprep.subr.mxu0 0.0
        %588 = vmatpush1.msra.mxu0 0.0
        %589 = vmatprep.subr.mxu0 0.0
        %590 = vmatpush1.msra.mxu0 0.0
        %591 = vmatprep.mubr.f32.mxu0 0.0
        %592 = vmatmul.mubr.f32.gmra.mrb[0].mxu0 %v454
        %v593 = vpop.f32.mrb[0].mxu0
        %v594 = vadd.f32 0.0, %v593
        %v595 = vpop.f32.mrb[0].mxu0
        %v596 = vadd.f32 0.0, %v595
        %597 = vdwg.mxu0
        %598 = vmatprep.subr.mxu0 %v283
        %599 = vmatpush1.msra.mxu0 %v282
        %600 = vmatprep.subr.mxu0 %v357
        %601 = vmatpush1.msra.mxu0 %v356
        %602 = vmatprep.subr.mxu0 %v424
        %603 = vmatpush1.msra.mxu0 %v423
        %604 = vmatprep.subr.mxu0 %v299
        %605 = vmatpush1.msra.mxu0 %v299
        %606 = vmatprep.subr.mxu0 0.0
        %607 = vmatpush1.msra.mxu0 0.0
        %608 = vmatprep.subr.mxu0 0.0
        %609 = vmatpush1.msra.mxu0 0.0
        %610 = vmatprep.subr.mxu0 0.0
        %611 = vmatpush1.msra.mxu0 0.0
        %612 = vmatprep.subr.mxu0 0.0
        %613 = vmatpush1.msra.mxu0 0.0
        %614 = vmatprep.subr.mxu0 0.0
        %615 = vmatpush1.msra.mxu0 0.0
        %616 = vmatprep.subr.mxu0 0.0
        %617 = vmatpush1.msra.mxu0 0.0
        %618 = vmatprep.subr.mxu0 0.0
        %619 = vmatpush1.msra.mxu0 0.0
        %620 = vmatprep.subr.mxu0 0.0
        %621 = vmatpush1.msra.mxu0 0.0
        %622 = vmatprep.subr.mxu0 0.0
        %623 = vmatpush1.msra.mxu0 0.0
        %624 = vmatprep.subr.mxu0 0.0
        %625 = vmatpush1.msra.mxu0 0.0
        %626 = vmatprep.subr.mxu0 0.0
        %627 = vmatpush1.msra.mxu0 0.0
        %628 = vmatprep.subr.mxu0 0.0
        %629 = vmatpush1.msra.mxu0 0.0
        %630 = vmatprep.subr.mxu0 0.0
        %631 = vmatpush1.msra.mxu0 0.0
        %632 = vmatprep.subr.mxu0 0.0
        %633 = vmatpush1.msra.mxu0 0.0
        %634 = vmatprep.subr.mxu0 0.0
        %635 = vmatpush1.msra.mxu0 0.0
        %636 = vmatprep.subr.mxu0 0.0
        %637 = vmatpush1.msra.mxu0 0.0
        %638 = vmatprep.subr.mxu0 0.0
        %639 = vmatpush1.msra.mxu0 0.0
        %640 = vmatprep.subr.mxu0 0.0
        %641 = vmatpush1.msra.mxu0 0.0
        %642 = vmatprep.subr.mxu0 0.0
        %643 = vmatpush1.msra.mxu0 0.0
        %644 = vmatprep.subr.mxu0 0.0
        %645 = vmatpush1.msra.mxu0 0.0
        %646 = vmatprep.subr.mxu0 0.0
        %647 = vmatpush1.msra.mxu0 0.0
        %648 = vmatprep.subr.mxu0 0.0
        %649 = vmatpush1.msra.mxu0 0.0
        %650 = vmatprep.subr.mxu0 0.0
        %651 = vmatpush1.msra.mxu0 0.0
        %652 = vmatprep.subr.mxu0 0.0
        %653 = vmatpush1.msra.mxu0 0.0
        %654 = vmatprep.subr.mxu0 0.0
        %655 = vmatpush1.msra.mxu0 0.0
        %656 = vmatprep.subr.mxu0 0.0
        %657 = vmatpush1.msra.mxu0 0.0
        %658 = vmatprep.subr.mxu0 0.0
        %659 = vmatpush1.msra.mxu0 0.0
        %660 = vmatprep.subr.mxu0 0.0
        %661 = vmatpush1.msra.mxu0 0.0
        %662 = vmatprep.mubr.f32.mxu0 0.0
        %663 = vmatmul.mubr.f32.gmra.mrb[0].mxu0 %v454
        %v664 = vpop.f32.mrb[0].mxu0
        %v665 = vadd.f32 0.0, %v664
        %v666 = vpop.f32.mrb[0].mxu0
        %v667 = vadd.f32 0.0, %v666
        %668 = vdwg.mxu0
        %669 = vmatprep.subr.mxu0 %v285
        %670 = vmatpush1.msra.mxu0 %v284
        %671 = vmatprep.subr.mxu0 %v359
        %672 = vmatpush1.msra.mxu0 %v358
        %673 = vmatprep.subr.mxu0 %v426
        %674 = vmatpush1.msra.mxu0 %v425
        %675 = vmatprep.subr.mxu0 %v299
        %676 = vmatpush1.msra.mxu0 %v299
        %677 = vmatprep.subr.mxu0 0.0
        %678 = vmatpush1.msra.mxu0 0.0
        %679 = vmatprep.subr.mxu0 0.0
        %680 = vmatpush1.msra.mxu0 0.0
        %681 = vmatprep.subr.mxu0 0.0
        %682 = vmatpush1.msra.mxu0 0.0
        %683 = vmatprep.subr.mxu0 0.0
        %684 = vmatpush1.msra.mxu0 0.0
        %685 = vmatprep.subr.mxu0 0.0
        %686 = vmatpush1.msra.mxu0 0.0
        %687 = vmatprep.subr.mxu0 0.0
        %688 = vmatpush1.msra.mxu0 0.0
        %689 = vmatprep.subr.mxu0 0.0
        %690 = vmatpush1.msra.mxu0 0.0
        %691 = vmatprep.subr.mxu0 0.0
        %692 = vmatpush1.msra.mxu0 0.0
        %693 = vmatprep.subr.mxu0 0.0
        %694 = vmatpush1.msra.mxu0 0.0
        %695 = vmatprep.subr.mxu0 0.0
        %696 = vmatpush1.msra.mxu0 0.0
        %697 = vmatprep.subr.mxu0 0.0
        %698 = vmatpush1.msra.mxu0 0.0
        %699 = vmatprep.subr.mxu0 0.0
        %700 = vmatpush1.msra.mxu0 0.0
        %701 = vmatprep.subr.mxu0 0.0
        %702 = vmatpush1.msra.mxu0 0.0
        %703 = vmatprep.subr.mxu0 0.0
        %704 = vmatpush1.msra.mxu0 0.0
        %705 = vmatprep.subr.mxu0 0.0
        %706 = vmatpush1.msra.mxu0 0.0
        %707 = vmatprep.subr.mxu0 0.0
        %708 = vmatpush1.msra.mxu0 0.0
        %709 = vmatprep.subr.mxu0 0.0
        %710 = vmatpush1.msra.mxu0 0.0
        %711 = vmatprep.subr.mxu0 0.0
        %712 = vmatpush1.msra.mxu0 0.0
        %713 = vmatprep.subr.mxu0 0.0
        %714 = vmatpush1.msra.mxu0 0.0
        %715 = vmatprep.subr.mxu0 0.0
        %716 = vmatpush1.msra.mxu0 0.0
        %717 = vmatprep.subr.mxu0 0.0
        %718 = vmatpush1.msra.mxu0 0.0
        %719 = vmatprep.subr.mxu0 0.0
        %720 = vmatpush1.msra.mxu0 0.0
        %721 = vmatprep.subr.mxu0 0.0
        %722 = vmatpush1.msra.mxu0 0.0
        %723 = vmatprep.subr.mxu0 0.0
        %724 = vmatpush1.msra.mxu0 0.0
        %725 = vmatprep.subr.mxu0 0.0
        %726 = vmatpush1.msra.mxu0 0.0
        %727 = vmatprep.subr.mxu0 0.0
        %728 = vmatpush1.msra.mxu0 0.0
        %729 = vmatprep.subr.mxu0 0.0
        %730 = vmatpush1.msra.mxu0 0.0
        %731 = vmatprep.subr.mxu0 0.0
        %732 = vmatpush1.msra.mxu0 0.0
        %733 = vmatprep.mubr.f32.mxu0 0.0
        %734 = vmatmul.mubr.f32.gmra.mrb[0].mxu0 %v454
        %v735 = vpop.f32.mrb[0].mxu0
        %v736 = vadd.f32 0.0, %v735
        %v737 = vpop.f32.mrb[0].mxu0
        %v738 = vadd.f32 0.0, %v737
        %739 = vdwg.mxu0
        %740 = vmatprep.subr.mxu0 %v287
        %741 = vmatpush1.msra.mxu0 %v286
        %742 = vmatprep.subr.mxu0 %v361
        %743 = vmatpush1.msra.mxu0 %v360
        %744 = vmatprep.subr.mxu0 %v428
        %745 = vmatpush1.msra.mxu0 %v427
        %746 = vmatprep.subr.mxu0 %v299
        %747 = vmatpush1.msra.mxu0 %v299
        %748 = vmatprep.subr.mxu0 0.0
        %749 = vmatpush1.msra.mxu0 0.0
        %750 = vmatprep.subr.mxu0 0.0
        %751 = vmatpush1.msra.mxu0 0.0
        %752 = vmatprep.subr.mxu0 0.0
        %753 = vmatpush1.msra.mxu0 0.0
        %754 = vmatprep.subr.mxu0 0.0
        %755 = vmatpush1.msra.mxu0 0.0
        %756 = vmatprep.subr.mxu0 0.0
        %757 = vmatpush1.msra.mxu0 0.0
        %758 = vmatprep.subr.mxu0 0.0
        %759 = vmatpush1.msra.mxu0 0.0
        %760 = vmatprep.subr.mxu0 0.0
        %761 = vmatpush1.msra.mxu0 0.0
        %762 = vmatprep.subr.mxu0 0.0
        %763 = vmatpush1.msra.mxu0 0.0
        %764 = vmatprep.subr.mxu0 0.0
        %765 = vmatpush1.msra.mxu0 0.0
        %766 = vmatprep.subr.mxu0 0.0
        %767 = vmatpush1.msra.mxu0 0.0
        %768 = vmatprep.subr.mxu0 0.0
        %769 = vmatpush1.msra.mxu0 0.0
        %770 = vmatprep.subr.mxu0 0.0
        %771 = vmatpush1.msra.mxu0 0.0
        %772 = vmatprep.subr.mxu0 0.0
        %773 = vmatpush1.msra.mxu0 0.0
        %774 = vmatprep.subr.mxu0 0.0
        %775 = vmatpush1.msra.mxu0 0.0
        %776 = vmatprep.subr.mxu0 0.0
        %777 = vmatpush1.msra.mxu0 0.0
        %778 = vmatprep.subr.mxu0 0.0
        %779 = vmatpush1.msra.mxu0 0.0
        %780 = vmatprep.subr.mxu0 0.0
        %781 = vmatpush1.msra.mxu0 0.0
        %782 = vmatprep.subr.mxu0 0.0
        %783 = vmatpush1.msra.mxu0 0.0
        %784 = vmatprep.subr.mxu0 0.0
        %785 = vmatpush1.msra.mxu0 0.0
        %786 = vmatprep.subr.mxu0 0.0
        %787 = vmatpush1.msra.mxu0 0.0
        %788 = vmatprep.subr.mxu0 0.0
        %789 = vmatpush1.msra.mxu0 0.0
        %790 = vmatprep.subr.mxu0 0.0
        %791 = vmatpush1.msra.mxu0 0.0
        %792 = vmatprep.subr.mxu0 0.0
        %793 = vmatpush1.msra.mxu0 0.0
        %794 = vmatprep.subr.mxu0 0.0
        %795 = vmatpush1.msra.mxu0 0.0
        %796 = vmatprep.subr.mxu0 0.0
        %797 = vmatpush1.msra.mxu0 0.0
        %798 = vmatprep.subr.mxu0 0.0
        %799 = vmatpush1.msra.mxu0 0.0
        %800 = vmatprep.subr.mxu0 0.0
        %801 = vmatpush1.msra.mxu0 0.0
        %802 = vmatprep.subr.mxu0 0.0
        %803 = vmatpush1.msra.mxu0 0.0
        %804 = vmatprep.mubr.f32.mxu0 0.0
        %805 = vmatmul.mubr.f32.gmra.mrb[0].mxu0 %v454
        %v806 = vpop.f32.mrb[0].mxu0
        %v807 = vadd.f32 0.0, %v806
        %v808 = vpop.f32.mrb[0].mxu0
        %v809 = vadd.f32 0.0, %v808
        %810 = vdwg.mxu0
        %811 = vmatprep.subr.mxu0 %v289
        %812 = vmatpush1.msra.mxu0 %v288
        %813 = vmatprep.subr.mxu0 %v363
        %814 = vmatpush1.msra.mxu0 %v362
        %815 = vmatprep.subr.mxu0 %v430
        %816 = vmatpush1.msra.mxu0 %v429
        %817 = vmatprep.subr.mxu0 %v299
        %818 = vmatpush1.msra.mxu0 %v299
        %819 = vmatprep.subr.mxu0 0.0
        %820 = vmatpush1.msra.mxu0 0.0
        %821 = vmatprep.subr.mxu0 0.0
        %822 = vmatpush1.msra.mxu0 0.0
        %823 = vmatprep.subr.mxu0 0.0
        %824 = vmatpush1.msra.mxu0 0.0
        %825 = vmatprep.subr.mxu0 0.0
        %826 = vmatpush1.msra.mxu0 0.0
        %827 = vmatprep.subr.mxu0 0.0
        %828 = vmatpush1.msra.mxu0 0.0
        %829 = vmatprep.subr.mxu0 0.0
        %830 = vmatpush1.msra.mxu0 0.0
        %831 = vmatprep.subr.mxu0 0.0
        %832 = vmatpush1.msra.mxu0 0.0
        %833 = vmatprep.subr.mxu0 0.0
        %834 = vmatpush1.msra.mxu0 0.0
        %835 = vmatprep.subr.mxu0 0.0
        %836 = vmatpush1.msra.mxu0 0.0
        %837 = vmatprep.subr.mxu0 0.0
        %838 = vmatpush1.msra.mxu0 0.0
        %839 = vmatprep.subr.mxu0 0.0
        %840 = vmatpush1.msra.mxu0 0.0
        %841 = vmatprep.subr.mxu0 0.0
        %842 = vmatpush1.msra.mxu0 0.0
        %843 = vmatprep.subr.mxu0 0.0
        %844 = vmatpush1.msra.mxu0 0.0
        %845 = vmatprep.subr.mxu0 0.0
        %846 = vmatpush1.msra.mxu0 0.0
        %847 = vmatprep.subr.mxu0 0.0
        %848 = vmatpush1.msra.mxu0 0.0
        %849 = vmatprep.subr.mxu0 0.0
        %850 = vmatpush1.msra.mxu0 0.0
        %851 = vmatprep.subr.mxu0 0.0
        %852 = vmatpush1.msra.mxu0 0.0
        %853 = vmatprep.subr.mxu0 0.0
        %854 = vmatpush1.msra.mxu0 0.0
        %855 = vmatprep.subr.mxu0 0.0
        %856 = vmatpush1.msra.mxu0 0.0
        %857 = vmatprep.subr.mxu0 0.0
        %858 = vmatpush1.msra.mxu0 0.0
        %859 = vmatprep.subr.mxu0 0.0
        %860 = vmatpush1.msra.mxu0 0.0
        %861 = vmatprep.subr.mxu0 0.0
        %862 = vmatpush1.msra.mxu0 0.0
        %863 = vmatprep.subr.mxu0 0.0
        %864 = vmatpush1.msra.mxu0 0.0
        %865 = vmatprep.subr.mxu0 0.0
        %866 = vmatpush1.msra.mxu0 0.0
        %867 = vmatprep.subr.mxu0 0.0
        %868 = vmatpush1.msra.mxu0 0.0
        %869 = vmatprep.subr.mxu0 0.0
        %870 = vmatpush1.msra.mxu0 0.0
        %871 = vmatprep.subr.mxu0 0.0
        %872 = vmatpush1.msra.mxu0 0.0
        %873 = vmatprep.subr.mxu0 0.0
        %874 = vmatpush1.msra.mxu0 0.0
        %875 = vmatprep.mubr.f32.mxu0 0.0
        %876 = vmatmul.mubr.f32.gmra.mrb[0].mxu0 %v454
        %v877 = vpop.f32.mrb[0].mxu0
        %v878 = vadd.f32 0.0, %v877
        %v879 = vpop.f32.mrb[0].mxu0
        %v880 = vadd.f32 0.0, %v879
        %881 = vdwg.mxu0
        %882 = vmatprep.subr.mxu0 %v291
        %883 = vmatpush1.msra.mxu0 %v290
        %884 = vmatprep.subr.mxu0 %v365
        %885 = vmatpush1.msra.mxu0 %v364
        %886 = vmatprep.subr.mxu0 %v432
        %887 = vmatpush1.msra.mxu0 %v431
        %888 = vmatprep.subr.mxu0 %v299
        %889 = vmatpush1.msra.mxu0 %v299
        %890 = vmatprep.subr.mxu0 0.0
        %891 = vmatpush1.msra.mxu0 0.0
        %892 = vmatprep.subr.mxu0 0.0
        %893 = vmatpush1.msra.mxu0 0.0
        %894 = vmatprep.subr.mxu0 0.0
        %895 = vmatpush1.msra.mxu0 0.0
        %896 = vmatprep.subr.mxu0 0.0
        %897 = vmatpush1.msra.mxu0 0.0
        %898 = vmatprep.subr.mxu0 0.0
        %899 = vmatpush1.msra.mxu0 0.0
        %900 = vmatprep.subr.mxu0 0.0
        %901 = vmatpush1.msra.mxu0 0.0
        %902 = vmatprep.subr.mxu0 0.0
        %903 = vmatpush1.msra.mxu0 0.0
        %904 = vmatprep.subr.mxu0 0.0
        %905 = vmatpush1.msra.mxu0 0.0
        %906 = vmatprep.subr.mxu0 0.0
        %907 = vmatpush1.msra.mxu0 0.0
        %908 = vmatprep.subr.mxu0 0.0
        %909 = vmatpush1.msra.mxu0 0.0
        %910 = vmatprep.subr.mxu0 0.0
        %911 = vmatpush1.msra.mxu0 0.0
        %912 = vmatprep.subr.mxu0 0.0
        %913 = vmatpush1.msra.mxu0 0.0
        %914 = vmatprep.subr.mxu0 0.0
        %915 = vmatpush1.msra.mxu0 0.0
        %916 = vmatprep.subr.mxu0 0.0
        %917 = vmatpush1.msra.mxu0 0.0
        %918 = vmatprep.subr.mxu0 0.0
        %919 = vmatpush1.msra.mxu0 0.0
        %920 = vmatprep.subr.mxu0 0.0
        %921 = vmatpush1.msra.mxu0 0.0
        %922 = vmatprep.subr.mxu0 0.0
        %923 = vmatpush1.msra.mxu0 0.0
        %924 = vmatprep.subr.mxu0 0.0
        %925 = vmatpush1.msra.mxu0 0.0
        %926 = vmatprep.subr.mxu0 0.0
        %927 = vmatpush1.msra.mxu0 0.0
        %928 = vmatprep.subr.mxu0 0.0
        %929 = vmatpush1.msra.mxu0 0.0
        %930 = vmatprep.subr.mxu0 0.0
        %931 = vmatpush1.msra.mxu0 0.0
        %932 = vmatprep.subr.mxu0 0.0
        %933 = vmatpush1.msra.mxu0 0.0
        %934 = vmatprep.subr.mxu0 0.0
        %935 = vmatpush1.msra.mxu0 0.0
        %936 = vmatprep.subr.mxu0 0.0
        %937 = vmatpush1.msra.mxu0 0.0
        %938 = vmatprep.subr.mxu0 0.0
        %939 = vmatpush1.msra.mxu0 0.0
        %940 = vmatprep.subr.mxu0 0.0
        %941 = vmatpush1.msra.mxu0 0.0
        %942 = vmatprep.subr.mxu0 0.0
        %943 = vmatpush1.msra.mxu0 0.0
        %944 = vmatprep.subr.mxu0 0.0
        %945 = vmatpush1.msra.mxu0 0.0
        %946 = vmatprep.mubr.f32.mxu0 0.0
        %947 = vmatmul.mubr.f32.gmra.mrb[0].mxu0 %v454
        %v948 = vpop.f32.mrb[0].mxu0
        %v949 = vadd.f32 0.0, %v948
        %v950 = vpop.f32.mrb[0].mxu0
        %v951 = vadd.f32 0.0, %v950
        %952 = vdwg.mxu0
        %953 = vmatprep.subr.mxu0 %v293
        %954 = vmatpush1.msra.mxu0 %v292
        %955 = vmatprep.subr.mxu0 %v367
        %956 = vmatpush1.msra.mxu0 %v366
        %957 = vmatprep.subr.mxu0 %v434
        %958 = vmatpush1.msra.mxu0 %v433
        %959 = vmatprep.subr.mxu0 %v299
        %960 = vmatpush1.msra.mxu0 %v299
        %961 = vmatprep.subr.mxu0 0.0
        %962 = vmatpush1.msra.mxu0 0.0
        %963 = vmatprep.subr.mxu0 0.0
        %964 = vmatpush1.msra.mxu0 0.0
        %965 = vmatprep.subr.mxu0 0.0
        %966 = vmatpush1.msra.mxu0 0.0
        %967 = vmatprep.subr.mxu0 0.0
        %968 = vmatpush1.msra.mxu0 0.0
        %969 = vmatprep.subr.mxu0 0.0
        %970 = vmatpush1.msra.mxu0 0.0
        %971 = vmatprep.subr.mxu0 0.0
        %972 = vmatpush1.msra.mxu0 0.0
        %973 = vmatprep.subr.mxu0 0.0
        %974 = vmatpush1.msra.mxu0 0.0
        %975 = vmatprep.subr.mxu0 0.0
        %976 = vmatpush1.msra.mxu0 0.0
        %977 = vmatprep.subr.mxu0 0.0
        %978 = vmatpush1.msra.mxu0 0.0
        %979 = vmatprep.subr.mxu0 0.0
        %980 = vmatpush1.msra.mxu0 0.0
        %981 = vmatprep.subr.mxu0 0.0
        %982 = vmatpush1.msra.mxu0 0.0
        %983 = vmatprep.subr.mxu0 0.0
        %984 = vmatpush1.msra.mxu0 0.0
        %985 = vmatprep.subr.mxu0 0.0
        %986 = vmatpush1.msra.mxu0 0.0
        %987 = vmatprep.subr.mxu0 0.0
        %988 = vmatpush1.msra.mxu0 0.0
        %989 = vmatprep.subr.mxu0 0.0
        %990 = vmatpush1.msra.mxu0 0.0
        %991 = vmatprep.subr.mxu0 0.0
        %992 = vmatpush1.msra.mxu0 0.0
        %993 = vmatprep.subr.mxu0 0.0
        %994 = vmatpush1.msra.mxu0 0.0
        %995 = vmatprep.subr.mxu0 0.0
        %996 = vmatpush1.msra.mxu0 0.0
        %997 = vmatprep.subr.mxu0 0.0
        %998 = vmatpush1.msra.mxu0 0.0
        %999 = vmatprep.subr.mxu0 0.0
        %1000 = vmatpush1.msra.mxu0 0.0
        %1001 = vmatprep.subr.mxu0 0.0
        %1002 = vmatpush1.msra.mxu0 0.0
        %1003 = vmatprep.subr.mxu0 0.0
        %1004 = vmatpush1.msra.mxu0 0.0
        %1005 = vmatprep.subr.mxu0 0.0
        %1006 = vmatpush1.msra.mxu0 0.0
        %1007 = vmatprep.subr.mxu0 0.0
        %1008 = vmatpush1.msra.mxu0 0.0
        %1009 = vmatprep.subr.mxu0 0.0
        %1010 = vmatpush1.msra.mxu0 0.0
        %1011 = vmatprep.subr.mxu0 0.0
        %1012 = vmatpush1.msra.mxu0 0.0
        %1013 = vmatprep.subr.mxu0 0.0
        %1014 = vmatpush1.msra.mxu0 0.0
        %1015 = vmatprep.subr.mxu0 0.0
        %1016 = vmatpush1.msra.mxu0 0.0
        %1017 = vmatprep.mubr.f32.mxu0 0.0
        %1018 = vmatmul.mubr.f32.gmra.mrb[0].mxu0 %v454
        %v1019 = vpop.f32.mrb[0].mxu0
        %v1020 = vadd.f32 0.0, %v1019
        %v1021 = vpop.f32.mrb[0].mxu0
        %v1022 = vadd.f32 0.0, %v1021
        %1023 = vdwg.mxu0
        %1024 = vst [vmem:[%s269] sm:$0xff] %v523
        %1025 = vst [vmem:[%s269 + $0x8] sm:$0xff] %v525
        %1026 = vst [vmem:[%s269 + $0x10] sm:$0xff] %v594
        %1027 = vst [vmem:[%s269 + $0x18] sm:$0xff] %v596
        %1028 = vst [vmem:[%s269 + $0x20] sm:$0xff] %v665
        %1029 = vst [vmem:[%s269 + $0x28] sm:$0xff] %v667
        %1030 = vst [vmem:[%s269 + $0x30] sm:$0xff] %v736
        %1031 = vst [vmem:[%s269 + $0x38] sm:$0xff] %v738
        %1032 = vst [vmem:[%s269 + $0x40] sm:$0xff] %v807
        %1033 = vst [vmem:[%s269 + $0x48] sm:$0xff] %v809
        %1034 = vst [vmem:[%s269 + $0x50] sm:$0xff] %v878
        %1035 = vst [vmem:[%s269 + $0x58] sm:$0xff] %v880
        %1036 = vst [vmem:[%s269 + $0x60] sm:$0xff] %v949
        %1037 = vst [vmem:[%s269 + $0x68] sm:$0xff] %v951
        %1038 = vst [vmem:[%s269 + $0x70] sm:$0xff] %v1020
        %1039 = vst [vmem:[%s269 + $0x78] sm:$0xff] %v1022
        %s1040 = sand.u32 %s126, 1
        %s1041 = scalar_lea.sflag [#allocation4], %s1040
        %s1042 = sand.u32 %s126, 1
        %s1043 = smul.addr %s1042, 128
        %s1044 = scalar_lea.vmem [#allocation8], %s1043
        // Predicated region
        $region45: #{tpu_custom_call.1} parent=31 // pred_check
          %p1045 = pneg %p136
        $region46: #{tpu_custom_call.1} parent=31 // pred_check_branch
          %1047 = sbr.rel (%p1045) target = $region48
        $region47: #{tpu_custom_call.1} parent=31 // pred_region
          %s1048 = smul.u32 16, %s28
          %s1050 = ssub.s32 2048, 2048
          %1051 = vsyncadd %s1041, %s1050
          %s1052 = smul.addr %s27, 32
          %s1053 = sadd.s32 %s1048, %s1052
          %s1054 = smul.addr %s1053, 128
          %s1055 = scalar_lea.hbm %s3, %s1054
          %s1057 = sshll.u32 %s1044, 4
          %s1058 = int_to_ptr.vmem [resolvable:$true] %s1057
          %1060 = dma.vmem_to_hbm [thread:$0]  %s1058, 2048, %s1055, %s1041
        $region48: #{tpu_custom_call.1} parent=31 // pred_fallthru
          _
      $region32: #{tpu_custom_call.1} parent=5 // pred_fallthru
        _
      %p1061 = scmp.le.s32.totalorder 2, %s18
      // Predicated region
      $region49: #{tpu_custom_call.1} parent=5 // pred_check
        %p1062 = pneg %p1061
      $region50: #{tpu_custom_call.1} parent=5 // pred_check_branch
        %1064 = sbr.rel (%p1062) target = $region52
      $region51: #{tpu_custom_call.1} parent=5 // pred_region
        %s1065 = ssub.s32 %s18, 2
        // Predicated region
        $region53: #{tpu_custom_call.1} parent=51 // pred_check
          %p1066 = pneg %p142
        $region54: #{tpu_custom_call.1} parent=51 // pred_check_branch
          %1068 = sbr.rel (%p1066) target = $region56
        $region55: #{tpu_custom_call.1} parent=51 // pred_region
          %s1069 = sand.u32 %s127, 1
          %s1070 = scalar_lea.sflag [#allocation4], %s1069
          %s1071 = sand.u32 %s127, 1
          %s1072 = smul.addr %s1071, 128
          %s1073 = scalar_lea.vmem [#allocation8], %s1072
          %1074 = dma.done %s1070, 2048
        $region56: #{tpu_custom_call.1} parent=51 // pred_fallthru
          _
      $region52: #{tpu_custom_call.1} parent=5 // pred_fallthru
        _
    $region6: #{tpu_custom_call.1} parent=1 // loop_footer
      %s22 = sadd.s32 1, %s18
    $region7: #{tpu_custom_call.1} parent=1 // loop_footer_branch
      %17 = sbr.rel target = $region3
    $region8: #{tpu_custom_call.1} parent=1 // loop_exit
      _
    %1075 = vsyncpa [#allocation3], 1
    %s1076 = scalar_lea.sflag [#allocation3], 1
    %1077 = vsyncpa %s1076, 1
    %1078 = vsyncpa [#allocation6], 1
    %s1079 = scalar_lea.sflag [#allocation6], 1
    %1080 = vsyncpa %s1079, 1
    %1081 = vsyncpa [#allocation4], 1
    %s1082 = scalar_lea.sflag [#allocation4], 1
    %1083 = vsyncpa %s1082, 1

</llo_original>
